<compile_context>
chip_gen: v6e
topology: v6e:2x2x1
jax: 0.10.0
libtpu: 0.0.40
codegen_flags: <defaults>
</compile_context>

<pallas_src>
import numpy as np
import jax
import jax.numpy as jnp
from jax import lax
from jax.experimental import pallas as pl
from jax.experimental.pallas import tpu as pltpu


def _prompt_kernel(x_ref, p1_ref, p2_ref, w_ref, b_ref, o_ref):
    # x_ref/p1_ref/p2_ref/o_ref: (C, TL)  (leading batch dim squeezed)
    # w_ref: (C, C) BN-folded 1x1 conv weight (out, in);  b_ref: (C, 1) BN-folded bias.
    s = x_ref[...] + p1_ref[...] + p2_ref[...]                       # VPU adds
    y = jnp.dot(w_ref[...], s, preferred_element_type=jnp.float32)   # MXU, lane-dense
    o_ref[...] = (y + b_ref[...]).astype(o_ref.dtype)


def _vmem_budgets():
    """Generation-aware (tile_budget_bytes, vmem_limit_bytes)."""
    try:
        phys = pltpu.get_tpu_info().vmem_capacity_bytes
    except Exception:
        phys = 64 * 1024 * 1024  # conservative (v7x-sized) fallback
    tile_budget = min(20 * 1024 * 1024, phys // 4)       # double-buffered streamed tiles
    vmem_limit = min((phys * 3) // 4, (tile_budget * 5) // 2)  # cover s/y intermediates
    return tile_budget, vmem_limit


def _pick_spatial_tile(Lp, C, budget_bytes, min_blocks):
    """Largest multiple-of-128 tile dividing Lp such that (3 in + 1 out) double-buffered
    f32 tiles fit `budget_bytes`, while giving at least `min_blocks` spatial grid steps
    when possible."""
    assert Lp % 128 == 0
    bytes_per_lane = 8 * C * 4                     # 4 arrays x 2 buffers x 4 B, per lane
    by_budget = max(128, (budget_bytes // bytes_per_lane) // 128 * 128)
    by_steps = max(128, (Lp // max(min_blocks, 1)) // 128 * 128)
    tl = max(128, min(Lp, by_budget, by_steps))
    while tl > 128 and Lp % tl != 0:
        tl -= 128
    return tl


def prompt_pallas(x, p1, p2, w_folded, b_folded):
    """Prompt forward. x: (N, C, H, W); p1/p2: (N or 1, C, H, W). Returns (N, C, H, W)."""
    N, C, H, W = x.shape
    assert w_folded.shape == (C, C) and b_folded.shape == (C, 1)
    for p in (p1, p2):
        assert p.shape[1:] == (C, H, W) and p.shape[0] in (1, N), p.shape

    L = H * W
    Lp = ((L + 127) // 128) * 128        # pad flattened spatial dim -> lane-dense stores
    pad = Lp - L

    tile_budget, vmem_limit = _vmem_budgets()
    min_blocks = max(1, -(-4 // N))      # >= ~4 total grid steps (megacore on v7x)
    TL = _pick_spatial_tile(Lp, C, tile_budget, min_blocks)
    assert Lp % TL == 0

    def flat(a):
        a = a.reshape(a.shape[0], C, L)  # contiguous trailing-dim reshape: free
        if pad:
            a = jnp.pad(a, ((0, 0), (0, 0), (0, pad)))
        return a

    xf, p1f, p2f = flat(x), flat(p1), flat(p2)

    def stream_spec(batched):
        if batched:
            return pl.BlockSpec((pl.Squeezed(), C, TL), lambda n, l: (n, 0, l))
        # Batch-broadcast prompt: stream one copy regardless of n (fewer HBM reads).
        return pl.BlockSpec((pl.Squeezed(), C, TL), lambda n, l: (0, 0, l))

    out = pl.pallas_call(
        _prompt_kernel,
        out_shape=jax.ShapeDtypeStruct((N, C, Lp), jnp.float32),
        grid_spec=pltpu.PrefetchScalarGridSpec(
            num_scalar_prefetch=0,
            grid=(N, Lp // TL),
            in_specs=[
                stream_spec(True),                           # x
                stream_spec(p1.shape[0] == N),               # p1
                stream_spec(p2.shape[0] == N),               # p2
                pl.BlockSpec((C, C), lambda n, l: (0, 0)),   # folded weight (resident)
                pl.BlockSpec((C, 1), lambda n, l: (0, 0)),   # folded bias (resident)
            ],
            out_specs=pl.BlockSpec((pl.Squeezed(), C, TL), lambda n, l: (n, 0, l)),
        ),
        compiler_params=pltpu.CompilerParams(
            dimension_semantics=("parallel", "parallel"),
            vmem_limit_bytes=int(vmem_limit),
        ),
    )(xf, p1f, p2f, w_folded, b_folded)

    if pad:
        out = out[:, :, :L]
    return out.reshape(N, C, H, W)


def make_params(in_channels, seed=0):
    """Deterministic synthetic params matching Prompt's ConvNormAct(in, in, 1, act=None):
    Conv2d(in, in, 1, bias=False) -> BatchNorm2d (eval).  Returns (kernel_params, raw_params)."""
    C = in_channels
    eps = 1e-5

    k0 = jax.random.PRNGKey(seed)
    w = jax.random.normal(k0, (C, C, 1, 1), jnp.float32) * 0.2   # Conv2d weight (O, I, 1, 1)

    gamma = 1.0 + 0.10 * jnp.arange(C, dtype=jnp.float32)
    beta = 0.05 * jnp.arange(C, dtype=jnp.float32)
    mean = 0.01 * jnp.arange(C, dtype=jnp.float32)
    var = 1.0 + 0.02 * jnp.arange(C, dtype=jnp.float32)

    # Fold BN into the 1x1 conv: y = (W x - m) * s + beta,  s = g / sqrt(v + eps)
    s = gamma / jnp.sqrt(var + eps)
    w_folded = w[:, :, 0, 0] * s[:, None]          # (out, in)
    b_folded = (beta - mean * s).reshape(C, 1)

    return (w_folded, b_folded), (w, gamma, beta, mean, var, eps)


def prompt_reference(x, p1, p2, raw_params):
    """Pure-JAX reference mirroring the PyTorch semantics (NCHW 1x1 conv + eval BN)."""
    w, gamma, beta, mean, var, eps = raw_params
    y = x + p1 + p2
    y = lax.conv_general_dilated(
        y, w, window_strides=(1, 1), padding=[(0, 0), (0, 0)],
        dimension_numbers=("NCHW", "OIHW", "NCHW"))
    y = (y - mean[None, :, None, None]) / jnp.sqrt(var + eps)[None, :, None, None]
    y = y * gamma[None, :, None, None] + beta[None, :, None, None]
    return y


if __name__ == "__main__":
    # Case 1: batch=2, channels=8, 16x16 spatial; p1 is batch-broadcast (1, C, H, W).
    N, C, H, W = 2, 8, 16, 16
    kx, kp1, kp2 = jax.random.split(jax.random.PRNGKey(0), 3)
    x = jax.random.normal(kx, (N, C, H, W), jnp.float32)
    p1 = jax.random.normal(kp1, (1, C, H, W), jnp.float32)   # broadcast prompt
    p2 = jax.random.normal(kp2, (N, C, H, W), jnp.float32)

    (w_folded, b_folded), raw_params = make_params(C, seed=0)

    out = jax.block_until_ready(prompt_pallas(x, p1, p2, w_folded, b_folded))
    ref = jax.block_until_ready(prompt_reference(x, p1, p2, raw_params))
    assert out.shape == (N, C, H, W), out.shape
    np.testing.assert_allclose(np.asarray(out), np.asarray(ref), rtol=1e-4, atol=1e-4)

    # Case 2: odd spatial size (H*W not a multiple of 128) exercises the padding path.
    N2, H2, W2 = 1, 10, 10
    kx2, kp3, kp4 = jax.random.split(jax.random.PRNGKey(1), 3)
    x2 = jax.random.normal(kx2, (N2, C, H2, W2), jnp.float32)
    q1 = jax.random.normal(kp3, (N2, C, H2, W2), jnp.float32)
    q2 = jax.random.normal(kp4, (N2, C, H2, W2), jnp.float32)

    out2 = jax.block_until_ready(prompt_pallas(x2, q1, q2, w_folded, b_folded))
    ref2 = jax.block_until_ready(prompt_reference(x2, q1, q2, raw_params))
    assert out2.shape == (N2, C, H2, W2), out2.shape
    np.testing.assert_allclose(np.asarray(out2), np.asarray(ref2), rtol=1e-4, atol=1e-4)

    print("KERNEL_OK")
</pallas_src>

<mosaic_0001>
module attributes {stable_mosaic.version = 11 : i64} {
  func.func @_prompt_kernel(%arg0: i32, %arg1: i32, %arg2: memref<1x8x128xf32, #tpu.memory_space<vmem>>, %arg3: memref<1x8x128xf32, #tpu.memory_space<vmem>>, %arg4: memref<1x8x128xf32, #tpu.memory_space<vmem>>, %arg5: memref<8x8xf32, #tpu.memory_space<vmem>>, %arg6: memref<8x1xf32, #tpu.memory_space<vmem>>, %arg7: memref<1x8x128xf32, #tpu.memory_space<vmem>>) attributes {dimension_semantics = [#tpu.dimension_semantics<parallel>, #tpu.dimension_semantics<parallel>], iteration_bounds = array<i64: 2, 2>, scalar_prefetch = 0 : i64, scratch_operands = 0 : i64, tpu.core_type = #tpu.core_type<tc>, window_params = [{transform_indices = @transform_0, window_bounds = array<i64: 1, 8, 128>}, {transform_indices = @transform_1, window_bounds = array<i64: 1, 8, 128>}, {transform_indices = @transform_2, window_bounds = array<i64: 1, 8, 128>}, {pipeline_mode = #tpu.pipeline_mode<synchronous>, transform_indices = @transform_3, window_bounds = array<i64: 8, 8>}, {pipeline_mode = #tpu.pipeline_mode<synchronous>, transform_indices = @transform_4, window_bounds = array<i64: 8, 1>}, {transform_indices = @transform_5, window_bounds = array<i64: 1, 8, 128>}]} {
    %c0 = arith.constant 0 : index
    %c0_0 = arith.constant 0 : index
    %c0_1 = arith.constant 0 : index
    %0 = vector.load %arg2[%c0, %c0_0, %c0_1] : memref<1x8x128xf32, #tpu.memory_space<vmem>>, vector<1x8x128xf32>
    %1 = vector.shape_cast %0 : vector<1x8x128xf32> to vector<8x128xf32>
    %c0_2 = arith.constant 0 : index
    %c0_3 = arith.constant 0 : index
    %c0_4 = arith.constant 0 : index
    %2 = vector.load %arg3[%c0_2, %c0_3, %c0_4] : memref<1x8x128xf32, #tpu.memory_space<vmem>>, vector<1x8x128xf32>
    %3 = vector.shape_cast %2 : vector<1x8x128xf32> to vector<8x128xf32>
    %4 = arith.addf %1, %3 : vector<8x128xf32>
    %c0_5 = arith.constant 0 : index
    %c0_6 = arith.constant 0 : index
    %c0_7 = arith.constant 0 : index
    %5 = vector.load %arg4[%c0_5, %c0_6, %c0_7] : memref<1x8x128xf32, #tpu.memory_space<vmem>>, vector<1x8x128xf32>
    %6 = vector.shape_cast %5 : vector<1x8x128xf32> to vector<8x128xf32>
    %7 = arith.addf %4, %6 : vector<8x128xf32>
    %c0_8 = arith.constant 0 : index
    %c0_9 = arith.constant 0 : index
    %8 = vector.load %arg5[%c0_8, %c0_9] : memref<8x8xf32, #tpu.memory_space<vmem>>, vector<8x8xf32>
    %cst = arith.constant dense<0.000000e+00> : vector<8x128xf32>
    %9 = tpu.matmul %8, %7, %cst {dimension_numbers = #tpu.dot_dimension_numbers<[1], [0], [0], [1], [0, 0, 1, 1], [], []>} : vector<8x8xf32>, vector<8x128xf32>, vector<8x128xf32> -> vector<8x128xf32>
    %c0_10 = arith.constant 0 : index
    %c0_11 = arith.constant 0 : index
    %10 = vector.load %arg6[%c0_10, %c0_11] : memref<8x1xf32, #tpu.memory_space<vmem>>, vector<8x1xf32>
    %11 = vector.broadcast %10 : vector<8x1xf32> to vector<8x128xf32>
    %12 = arith.addf %9, %11 : vector<8x128xf32>
    %c0_12 = arith.constant 0 : index
    %c0_13 = arith.constant 0 : index
    %c0_14 = arith.constant 0 : index
    %13 = vector.load %arg7[%c0_12, %c0_13, %c0_14] : memref<1x8x128xf32, #tpu.memory_space<vmem>>, vector<1x8x128xf32>
    %14 = vector.shape_cast %13 : vector<1x8x128xf32> to vector<8x128xf32>
    %15 = vector.shape_cast %12 : vector<8x128xf32> to vector<1x8x128xf32>
    tpu.vector_store %arg7[%c0_12, %c0_13, %c0_14], %15 {strides = array<i32>} : memref<1x8x128xf32, #tpu.memory_space<vmem>>, vector<1x8x128xf32>,
    return
  }
  func.func @transform_0(%arg0: i32, %arg1: i32) -> (i32, i32, i32) {
    %c0_i32 = arith.constant 0 : i32
    %c0_i32_0 = arith.constant 0 : i32
    return %arg0, %c0_i32, %arg1 : i32, i32, i32
  }
  func.func @transform_1(%arg0: i32, %arg1: i32) -> (i32, i32, i32) {
    %c0_i32 = arith.constant 0 : i32
    %c0_i32_0 = arith.constant 0 : i32
    %c0_i32_1 = arith.constant 0 : i32
    return %c0_i32, %c0_i32_0, %arg1 : i32, i32, i32
  }
  func.func @transform_2(%arg0: i32, %arg1: i32) -> (i32, i32, i32) {
    %c0_i32 = arith.constant 0 : i32
    %c0_i32_0 = arith.constant 0 : i32
    return %arg0, %c0_i32, %arg1 : i32, i32, i32
  }
  func.func @transform_3(%arg0: i32, %arg1: i32) -> (i32, i32) {
    %c0_i32 = arith.constant 0 : i32
    %c0_i32_0 = arith.constant 0 : i32
    %c0_i32_1 = arith.constant 0 : i32
    return %c0_i32, %c0_i32_0 : i32, i32
  }
  func.func @transform_4(%arg0: i32, %arg1: i32) -> (i32, i32) {
    %c0_i32 = arith.constant 0 : i32
    %c0_i32_0 = arith.constant 0 : i32
    %c0_i32_1 = arith.constant 0 : i32
    return %c0_i32, %c0_i32_0 : i32, i32
  }
  func.func @transform_5(%arg0: i32, %arg1: i32) -> (i32, i32, i32) {
    %c0_i32 = arith.constant 0 : i32
    %c0_i32_0 = arith.constant 0 : i32
    return %arg0, %c0_i32, %arg1 : i32, i32, i32
  }
}

</mosaic_0001>

<llo_original>
// kernel: tpu_custom_call.1
$region0: #{tpu_custom_call.1}
  #allocation0 [shape = 'u32[]', space=smem, size = 0x4, offset = 0x4, fixed_abs, tag = 'smem constant byte address 0x4 - core index']
  #allocation1 [shape = 'u32[144,128]{1,0:T(1,128)}', space=vmem, size = 0x12000, scoped, tag = 'internal scratch']
  %s0 = inlined_call_operand.hbm [shape: f32[2,8,256], index: 0, kind: input, shape index: {}]
  %s1 = inlined_call_operand.hbm [shape: f32[1,8,256], index: 1, kind: input, shape index: {}]
  %s2 = inlined_call_operand.hbm [shape: f32[2,8,256], index: 2, kind: input, shape index: {}]
  %s3 = inlined_call_operand.vmem [shape: f32[8,8], index: 3, kind: input, shape index: {}]
  %s4 = inlined_call_operand.vmem [shape: f32[8,1], index: 4, kind: input, shape index: {}]
  %s5 = inlined_call_operand.hbm [shape: f32[2,8,256], index: 5, kind: output, shape index: {}]
  %s6 = sld [smem:[#allocation0]]
  $region65: #{tpu_custom_call.1} parent=0
    _
  %s8 = ssub.s32 1, %s6
  %s9 = scalar_select 0, %s8, %s6
  $region1: #{tpu_custom_call.1} parent=0
    #allocation2 [shape = 'u8[8192]{0}', space=vmem, size = 0x2000, scoped, tag = 'input window, operand 0']
    #allocation3 [shape = 's32[2]{0}', space=sflag, size = 0x8, scoped, tag = 'scoped memory for tpu_custom_call.1']
    #allocation4 [shape = 's32[2]{0}', space=sflag, size = 0x8, scoped, tag = 'scoped memory for tpu_custom_call.1']
    #allocation5 [shape = 'u8[8192]{0}', space=vmem, size = 0x2000, scoped, tag = 'input window, operand 1']
    #allocation6 [shape = 's32[2]{0}', space=sflag, size = 0x8, scoped, tag = 'scoped memory for tpu_custom_call.1']
    #allocation7 [shape = 'u8[8192]{0}', space=vmem, size = 0x2000, scoped, tag = 'input window, operand 2']
    #allocation8 [shape = 'u8[8192]{0}', space=vmem, size = 0x2000, scoped, tag = 'output window, operand 0']
    %10 = vsyncpa [#allocation3], 0
    %s11 = scalar_lea.sflag [#allocation3], 1
    %12 = vsyncpa %s11, 0
    %13 = vsyncpa [#allocation6], 0
    %s14 = scalar_lea.sflag [#allocation6], 1
    %15 = vsyncpa %s14, 0
    %16 = vsyncpa [#allocation4], 0
    %s17 = scalar_lea.sflag [#allocation4], 1
    %18 = vsyncpa %s17, 0
    loop: start=0, step=1, limit=6
    $region2: #{tpu_custom_call.1} parent=1 // loop_pre_header
      _
    $region3: #{tpu_custom_call.1} parent=1 // loop_header
      %s20 = sphi 0, %s24
      %p21 = scmp.ge.s32.totalorder %s20, 6
      %s27 = sphi 0, %s39
      %s28 = sphi 0, %s35
      %s29 = sphi 0, %s27
      %s30 = sphi 0, %s28
      %s31 = sphi 0, %s29
      %s32 = sphi 0, %s30
      %s44 = sphi 0, %s46
      %s47 = sphi 0, %s44
      %s48 = sphi 0, %s47
      %s64 = sphi 0, %s48
      %s70 = sphi 0, %s72
      %s73 = sphi 0, %s70
      %s74 = sphi 0, %s73
      %s90 = sphi 0, %s74
      %s98 = sphi 0, %s100
      %s101 = sphi 0, %s98
      %s102 = sphi 0, %s101
      %s118 = sphi 0, %s102
      %s122 = sphi 0, %s122
      %s124 = sphi 0, %s122
      %s125 = sphi 0, %s124
      %s139 = sphi 0, %s125
      %s143 = sphi 0, %s143
      %s145 = sphi 0, %s143
      %s146 = sphi 0, %s145
      %s160 = sphi 0, %s146
      %s168 = sphi 0, %s170
      %s171 = sphi 0, %s168
      %s172 = sphi 0, %s171
      %s188 = sphi 0, %s172
    $region4: #{tpu_custom_call.1} parent=1 // loop_header_branch
      %23 = sbr.rel (%p21) target = $region8
    $region5: #{tpu_custom_call.1} parent=1 // loop_body
      %s25 = ssub.s32 %s20, 1
      %s26 = ssub.s32 %s20, 2
      %s33 = sadd.s32 1, %s28
      %p34 = scmp.ge.s32.totalorder %s33, 2
      %s35 = scalar_select %p34, 0, %s33
      %s36 = sadd.s32 1, %s27
      %s37 = scalar_select %p34, %s36, %s27
      %p38 = scmp.ge.s32.totalorder %s37, 2
      %s39 = scalar_select %p38, 0, %s37
      %s40 = ssub.s32 %s27, %s39
      %s41 = ssub.s32 %s28, %s35
      %s42 = sor.u32 %s40, %s41
      %p43 = scmp.eq.s32.totalorder %s42, 0
      %s45 = sadd.s32 %s44, 1
      %s46 = scalar_select %p43, %s44, %s45
      %p49 = pneg %p43
      %p50 = scmp.eq.s32.totalorder %s20, 3
      %p51 = por %p49, %p50
      %p52 = scmp.ne.s32.totalorder %s44, %s47
      %p53 = scmp.eq.s32.totalorder %s20, 0
      %p54 = por %p52, %p53
      %p55 = scmp.ne.s32.totalorder %s44, %s47
      %p56 = scmp.eq.s32.totalorder %s25, 3
      %p57 = por %p55, %p56
      %p58 = scmp.ne.s32.totalorder %s47, %s48
      %p59 = scmp.eq.s32.totalorder %s25, 0
      %p60 = por %p58, %p59
      %p61 = scmp.ne.s32.totalorder %s47, %s48
      %p62 = scmp.eq.s32.totalorder %s26, 3
      %p63 = por %p61, %p62
      %p65 = scmp.ne.s32.totalorder %s48, %s64
      %p66 = scmp.eq.s32.totalorder %s26, 0
      %p67 = por %p65, %p66
      %s68 = ssub.s32 %s28, %s35
      %p69 = scmp.eq.s32.totalorder %s68, 0
      %s71 = sadd.s32 %s70, 1
      %s72 = scalar_select %p69, %s70, %s71
      %p75 = pneg %p69
      %p76 = scmp.eq.s32.totalorder %s20, 3
      %p77 = por %p75, %p76
      %p78 = scmp.ne.s32.totalorder %s70, %s73
      %p79 = scmp.eq.s32.totalorder %s20, 0
      %p80 = por %p78, %p79
      %p81 = scmp.ne.s32.totalorder %s70, %s73
      %p82 = scmp.eq.s32.totalorder %s25, 3
      %p83 = por %p81, %p82
      %p84 = scmp.ne.s32.totalorder %s73, %s74
      %p85 = scmp.eq.s32.totalorder %s25, 0
      %p86 = por %p84, %p85
      %p87 = scmp.ne.s32.totalorder %s73, %s74
      %p88 = scmp.eq.s32.totalorder %s26, 3
      %p89 = por %p87, %p88
      %p91 = scmp.ne.s32.totalorder %s74, %s90
      %p92 = scmp.eq.s32.totalorder %s26, 0
      %p93 = por %p91, %p92
      %s94 = ssub.s32 %s27, %s39
      %s95 = ssub.s32 %s28, %s35
      %s96 = sor.u32 %s94, %s95
      %p97 = scmp.eq.s32.totalorder %s96, 0
      %s99 = sadd.s32 %s98, 1
      %s100 = scalar_select %p97, %s98, %s99
      %p103 = pneg %p97
      %p104 = scmp.eq.s32.totalorder %s20, 3
      %p105 = por %p103, %p104
      %p106 = scmp.ne.s32.totalorder %s98, %s101
      %p107 = scmp.eq.s32.totalorder %s20, 0
      %p108 = por %p106, %p107
      %p109 = scmp.ne.s32.totalorder %s98, %s101
      %p110 = scmp.eq.s32.totalorder %s25, 3
      %p111 = por %p109, %p110
      %p112 = scmp.ne.s32.totalorder %s101, %s102
      %p113 = scmp.eq.s32.totalorder %s25, 0
      %p114 = por %p112, %p113
      %p115 = scmp.ne.s32.totalorder %s101, %s102
      %p116 = scmp.eq.s32.totalorder %s26, 3
      %p117 = por %p115, %p116
      %p119 = scmp.ne.s32.totalorder %s102, %s118
      %p120 = scmp.eq.s32.totalorder %s26, 0
      %p121 = por %p119, %p120
      %s123 = sadd.s32 %s122, 1
      %p126 = scmp.eq.s32.totalorder %s20, 3
      %p127 = scmp.ne.s32.totalorder %s122, %s124
      %p128 = scmp.eq.s32.totalorder %s20, 0
      %p129 = por %p127, %p128
      %p130 = scmp.ne.s32.totalorder %s122, %s124
      %p131 = scmp.eq.s32.totalorder %s25, 3
      %p132 = por %p130, %p131
      %p133 = scmp.ne.s32.totalorder %s124, %s125
      %p134 = scmp.eq.s32.totalorder %s25, 0
      %p135 = por %p133, %p134
      %p136 = scmp.ne.s32.totalorder %s124, %s125
      %p137 = scmp.eq.s32.totalorder %s26, 3
      %p138 = por %p136, %p137
      %p140 = scmp.ne.s32.totalorder %s125, %s139
      %p141 = scmp.eq.s32.totalorder %s26, 0
      %p142 = por %p140, %p141
      %s144 = sadd.s32 %s143, 1
      %p147 = scmp.eq.s32.totalorder %s20, 3
      %p148 = scmp.ne.s32.totalorder %s143, %s145
      %p149 = scmp.eq.s32.totalorder %s20, 0
      %p150 = por %p148, %p149
      %p151 = scmp.ne.s32.totalorder %s143, %s145
      %p152 = scmp.eq.s32.totalorder %s25, 3
      %p153 = por %p151, %p152
      %p154 = scmp.ne.s32.totalorder %s145, %s146
      %p155 = scmp.eq.s32.totalorder %s25, 0
      %p156 = por %p154, %p155
      %p157 = scmp.ne.s32.totalorder %s145, %s146
      %p158 = scmp.eq.s32.totalorder %s26, 3
      %p159 = por %p157, %p158
      %p161 = scmp.ne.s32.totalorder %s146, %s160
      %p162 = scmp.eq.s32.totalorder %s26, 0
      %p163 = por %p161, %p162
      %s164 = ssub.s32 %s27, %s39
      %s165 = ssub.s32 %s28, %s35
      %s166 = sor.u32 %s164, %s165
      %p167 = scmp.eq.s32.totalorder %s166, 0
      %s169 = sadd.s32 %s168, 1
      %s170 = scalar_select %p167, %s168, %s169
      %p173 = pneg %p167
      %p174 = scmp.eq.s32.totalorder %s20, 3
      %p175 = por %p173, %p174
      %p176 = scmp.ne.s32.totalorder %s168, %s171
      %p177 = scmp.eq.s32.totalorder %s20, 0
      %p178 = por %p176, %p177
      %p179 = scmp.ne.s32.totalorder %s168, %s171
      %p180 = scmp.eq.s32.totalorder %s25, 3
      %p181 = por %p179, %p180
      %p182 = scmp.ne.s32.totalorder %s171, %s172
      %p183 = scmp.eq.s32.totalorder %s25, 0
      %p184 = por %p182, %p183
      %p185 = scmp.ne.s32.totalorder %s171, %s172
      %p186 = scmp.eq.s32.totalorder %s26, 3
      %p187 = por %p185, %p186
      %p189 = scmp.ne.s32.totalorder %s172, %s188
      %p190 = scmp.eq.s32.totalorder %s26, 0
      %p191 = por %p189, %p190
      %p192 = scmp.le.s32.totalorder 1, %s20
      %p193 = scmp.lt.s32.totalorder %s20, 5
      %p194 = pnand %p192, %p193
      %p195 = pneg %p194
      // Predicated region
      $region9: #{tpu_custom_call.1} parent=5 // pred_check
        _
      $region10: #{tpu_custom_call.1} parent=5 // pred_check_branch
        %197 = sbr.rel (%p194) target = $region12
      $region11: #{tpu_custom_call.1} parent=5 // pred_region
        %s198 = ssub.s32 %s20, 1
        // Predicated region
        $region13: #{tpu_custom_call.1} parent=11 // pred_check
          %p199 = pneg %p135
        $region14: #{tpu_custom_call.1} parent=11 // pred_check_branch
          %201 = sbr.rel (%p199) target = $region16
        $region15: #{tpu_custom_call.1} parent=11 // pred_region
          _
        $region16: #{tpu_custom_call.1} parent=11 // pred_fallthru
          _
        // Predicated region
        $region17: #{tpu_custom_call.1} parent=11 // pred_check
          %p202 = pneg %p156
        $region18: #{tpu_custom_call.1} parent=11 // pred_check_branch
          %204 = sbr.rel (%p202) target = $region20
        $region19: #{tpu_custom_call.1} parent=11 // pred_region
          _
        $region20: #{tpu_custom_call.1} parent=11 // pred_fallthru
          _
      $region12: #{tpu_custom_call.1} parent=5 // pred_fallthru
        _
      %p205 = scmp.lt.s32.totalorder %s20, 4
      // Predicated region
      $region21: #{tpu_custom_call.1} parent=5 // pred_check
        %p206 = pneg %p205
      $region22: #{tpu_custom_call.1} parent=5 // pred_check_branch
        %208 = sbr.rel (%p206) target = $region24
      $region23: #{tpu_custom_call.1} parent=5 // pred_region
        // Predicated region
        $region25: #{tpu_custom_call.1} parent=23 // pred_check
          %p209 = pneg %p54
        $region26: #{tpu_custom_call.1} parent=23 // pred_check_branch
          %211 = sbr.rel (%p209) target = $region28
        $region27: #{tpu_custom_call.1} parent=23 // pred_region
          %s212 = sand.u32 %s44, 1
          %s213 = scalar_lea.sflag [#allocation3], %s212
          %s214 = sand.u32 %s44, 1
          %s215 = smul.addr %s214, 8
          %s216 = scalar_lea.vmem [#allocation2], %s215
          %s218 = ssub.s32 128, 128
          %219 = vsyncadd %s213, %s218
          %s220 = smul.addr %s27, 2
          %s221 = sadd.s32 %s28, %s220
          %s222 = smul.addr %s221, 128
          %s223 = scalar_lea.hbm %s0, %s222
          %s225 = sshll.u32 %s216, 4
          %s226 = int_to_ptr.vmem [resolvable:$true] %s225
          %228 = dma.hbm_to_vmem [thread:$0]  %s223, 128, %s226, %s213
        $region28: #{tpu_custom_call.1} parent=23 // pred_fallthru
          _
        // Predicated region
        $region29: #{tpu_custom_call.1} parent=23 // pred_check
          %p229 = pneg %p80
        $region30: #{tpu_custom_call.1} parent=23 // pred_check_branch
          %231 = sbr.rel (%p229) target = $region32
        $region31: #{tpu_custom_call.1} parent=23 // pred_region
          %s232 = sand.u32 %s20, 1
          %s233 = scalar_lea.sflag [#allocation6], %s232
          %s234 = sand.u32 %s70, 1
          %s235 = smul.addr %s234, 8
          %s236 = scalar_lea.vmem [#allocation5], %s235
          %s238 = ssub.s32 128, 128
          %239 = vsyncadd %s233, %s238
          %s240 = smul.addr %s28, 128
          %s241 = scalar_lea.hbm %s1, %s240
          %s243 = sshll.u32 %s236, 4
          %s244 = int_to_ptr.vmem [resolvable:$true] %s243
          %246 = dma.hbm_to_vmem [thread:$0]  %s241, 128, %s244, %s233
        $region32: #{tpu_custom_call.1} parent=23 // pred_fallthru
          _
        // Predicated region
        $region33: #{tpu_custom_call.1} parent=23 // pred_check
          %p247 = pneg %p108
        $region34: #{tpu_custom_call.1} parent=23 // pred_check_branch
          %249 = sbr.rel (%p247) target = $region36
        $region35: #{tpu_custom_call.1} parent=23 // pred_region
          %s250 = sand.u32 %s20, 1
          %s251 = scalar_lea.sflag [#allocation6], %s250
          %s252 = sand.u32 %s98, 1
          %s253 = smul.addr %s252, 8
          %s254 = scalar_lea.vmem [#allocation7], %s253
          %s256 = ssub.s32 128, 128
          %257 = vsyncadd %s251, %s256
          %s258 = smul.addr %s27, 2
          %s259 = sadd.s32 %s28, %s258
          %s260 = smul.addr %s259, 128
          %s261 = scalar_lea.hbm %s2, %s260
          %s263 = sshll.u32 %s254, 4
          %s264 = int_to_ptr.vmem [resolvable:$true] %s263
          %266 = dma.hbm_to_vmem [thread:$0]  %s261, 128, %s264, %s251
        $region36: #{tpu_custom_call.1} parent=23 // pred_fallthru
          _
      $region24: #{tpu_custom_call.1} parent=5 // pred_fallthru
        _
      %p267 = scmp.le.s32.totalorder 1, %s20
      %p268 = scmp.lt.s32.totalorder %s20, 5
      %p269 = pnand %p267, %p268
      %p270 = pneg %p269
      // Predicated region
      $region37: #{tpu_custom_call.1} parent=5 // pred_check
        _
      $region38: #{tpu_custom_call.1} parent=5 // pred_check_branch
        %272 = sbr.rel (%p269) target = $region40
      $region39: #{tpu_custom_call.1} parent=5 // pred_region
        %s273 = ssub.s32 %s20, 1
        %s274 = sand.u32 %s47, 1
        %s275 = scalar_lea.sflag [#allocation3], %s274
        %s276 = sand.u32 %s47, 1
        %s277 = smul.addr %s276, 8
        %s278 = scalar_lea.vmem [#allocation2], %s277
        // Predicated region
        $region41: #{tpu_custom_call.1} parent=39 // pred_check
          %p279 = pneg %p60
        $region42: #{tpu_custom_call.1} parent=39 // pred_check_branch
          %281 = sbr.rel (%p279) target = $region44
        $region43: #{tpu_custom_call.1} parent=39 // pred_region
          %282 = dma.done %s275, 128
        $region44: #{tpu_custom_call.1} parent=39 // pred_fallthru
          _
        %s283 = sand.u32 %s25, 1
        %s284 = scalar_lea.sflag [#allocation6], %s283
        %s285 = sand.u32 %s73, 1
        %s286 = smul.addr %s285, 8
        %s287 = scalar_lea.vmem [#allocation5], %s286
        // Predicated region
        $region45: #{tpu_custom_call.1} parent=39 // pred_check
          %p288 = pneg %p86
        $region46: #{tpu_custom_call.1} parent=39 // pred_check_branch
          %290 = sbr.rel (%p288) target = $region48
        $region47: #{tpu_custom_call.1} parent=39 // pred_region
          %291 = dma.done %s284, 128
        $region48: #{tpu_custom_call.1} parent=39 // pred_fallthru
          _
        %s292 = sand.u32 %s25, 1
        %s293 = scalar_lea.sflag [#allocation6], %s292
        %s294 = sand.u32 %s101, 1
        %s295 = smul.addr %s294, 8
        %s296 = scalar_lea.vmem [#allocation7], %s295
        // Predicated region
        $region49: #{tpu_custom_call.1} parent=39 // pred_check
          %p297 = pneg %p114
        $region50: #{tpu_custom_call.1} parent=39 // pred_check_branch
          %299 = sbr.rel (%p297) target = $region52
        $region51: #{tpu_custom_call.1} parent=39 // pred_region
          %300 = dma.done %s293, 128
        $region52: #{tpu_custom_call.1} parent=39 // pred_fallthru
          _
        %s301 = sand.u32 %s47, 1
        %s302 = scalar_lea.sflag [#allocation3], %s301
        %s303 = sand.u32 %s47, 1
        %s304 = smul.addr %s303, 8
        %s305 = scalar_lea.vmem [#allocation2], %s304
        %p306 = pneg %p60
        %p307 = pneg %p57
        %s308 = sand.u32 %s25, 1
        %s309 = scalar_lea.sflag [#allocation6], %s308
        %s310 = sand.u32 %s73, 1
        %s311 = smul.addr %s310, 8
        %s312 = scalar_lea.vmem [#allocation5], %s311
        %p313 = pneg %p86
        %p314 = pneg %p83
        %s315 = sand.u32 %s25, 1
        %s316 = scalar_lea.sflag [#allocation6], %s315
        %s317 = sand.u32 %s101, 1
        %s318 = smul.addr %s317, 8
        %s319 = scalar_lea.vmem [#allocation7], %s318
        %p320 = pneg %p114
        %p321 = pneg %p111
        %p322 = pneg %p135
        %p323 = pneg %p132
        %p324 = pneg %p156
        %p325 = pneg %p153
        %p326 = pneg %p184
        %p327 = pneg %p181
        %s328 = sand.u32 %s171, 1
        %s329 = scalar_lea.sflag [#allocation4], %s328
        %s330 = sand.u32 %s171, 1
        %s331 = smul.addr %s330, 8
        %s332 = scalar_lea.vmem [#allocation8], %s331
        %v333 = vld [vmem:[%s278] sm:$0xff]
        %v334 = vld [vmem:[%s287] sm:$0xff]
        %v335 = vadd.f32 %v333, %v334
        %v336 = vld [vmem:[%s296] sm:$0xff]
        %v337 = vadd.f32 %v335, %v336
        %v338 = vld [vmem:[%s3] sm:$0xff]
        %v339 = vld [vmem:[%s4] sm:$0xff]
        %341 = vset.pattern.permute.xlu0 0
        %342 = vperm.xlu0 %341, %v339
        %v343 = vpop.permute.xlu0 %342
        %vm345 = vcmask 64512
        %v347 = vsel %vm345, %v338, 0
        %349 = vmatprep.subr.mxu0 0.0
        %350 = vmatpush1.msra.mxu0 0.0
        %351 = vmatprep.subr.mxu0 0.0
        %352 = vmatpush1.msra.mxu0 0.0
        %353 = vmatprep.subr.mxu0 0.0
        %354 = vmatpush1.msra.mxu0 0.0
        %355 = vmatprep.subr.mxu0 0.0
        %356 = vmatpush1.msra.mxu0 0.0
        %357 = vmatprep.subr.mxu0 0.0
        %358 = vmatpush1.msra.mxu0 0.0
        %359 = vmatprep.subr.mxu0 0.0
        %360 = vmatpush1.msra.mxu0 0.0
        %361 = vmatprep.subr.mxu0 0.0
        %362 = vmatpush1.msra.mxu0 0.0
        %363 = vmatprep.subr.mxu0 0.0
        %364 = vmatpush1.msra.mxu0 0.0
        %365 = vmatprep.subr.mxu0 0.0
        %366 = vmatpush1.msra.mxu0 0.0
        %367 = vmatprep.subr.mxu0 0.0
        %368 = vmatpush1.msra.mxu0 0.0
        %369 = vmatprep.subr.mxu0 0.0
        %370 = vmatpush1.msra.mxu0 0.0
        %371 = vmatprep.subr.mxu0 0.0
        %372 = vmatpush1.msra.mxu0 0.0
        %373 = vmatprep.subr.mxu0 0.0
        %374 = vmatpush1.msra.mxu0 0.0
        %375 = vmatprep.subr.mxu0 0.0
        %376 = vmatpush1.msra.mxu0 0.0
        %377 = vmatprep.subr.mxu0 0.0
        %378 = vmatpush1.msra.mxu0 0.0
        %379 = vmatprep.subr.mxu0 0.0
        %380 = vmatpush1.msra.mxu0 %v337
        %381 = vmatprep.subr.mxu0 0.0
        %382 = vmatpush2.msra.mxu0 0.0
        %383 = vmatprep.subr.mxu0 0.0
        %384 = vmatpush2.msra.mxu0 0.0
        %385 = vmatprep.subr.mxu0 0.0
        %386 = vmatpush2.msra.mxu0 0.0
        %387 = vmatprep.subr.mxu0 0.0
        %388 = vmatpush2.msra.mxu0 0.0
        %389 = vmatprep.subr.mxu0 0.0
        %390 = vmatpush2.msra.mxu0 0.0
        %391 = vmatprep.subr.mxu0 0.0
        %392 = vmatpush2.msra.mxu0 0.0
        %393 = vmatprep.subr.mxu0 0.0
        %394 = vmatpush2.msra.mxu0 0.0
        %395 = vmatprep.subr.mxu0 0.0
        %396 = vmatpush2.msra.mxu0 0.0
        %397 = vmatprep.subr.mxu0 0.0
        %398 = vmatpush2.msra.mxu0 0.0
        %399 = vmatprep.subr.mxu0 0.0
        %400 = vmatpush2.msra.mxu0 0.0
        %401 = vmatprep.subr.mxu0 0.0
        %402 = vmatpush2.msra.mxu0 0.0
        %403 = vmatprep.subr.mxu0 0.0
        %404 = vmatpush2.msra.mxu0 0.0
        %405 = vmatprep.subr.mxu0 0.0
        %406 = vmatpush2.msra.mxu0 0.0
        %407 = vmatprep.subr.mxu0 0.0
        %408 = vmatpush2.msra.mxu0 0.0
        %409 = vmatprep.subr.mxu0 0.0
        %410 = vmatpush2.msra.mxu0 0.0
        %411 = vmatprep.subr.mxu0 0.0
        %412 = vmatpush2.msra.mxu0 0.0
        %413 = vmatprep.mubr.f32.mxu0 0.0
        %414 = vmatmul.mubr.f32.gmra.mxu0 %v347
        %v415 = vpop.f32.mrf.mxu0
        %v416 = vadd.f32 %v343, %v415
        %v417 = vpop.f32.mrf.mxu0
        %418 = vdwg.mxu0
        %419 = vst [vmem:[%s332] sm:$0xff] %v416
        %s420 = sand.u32 %s171, 1
        %s421 = scalar_lea.sflag [#allocation4], %s420
        %s422 = sand.u32 %s171, 1
        %s423 = smul.addr %s422, 8
        %s424 = scalar_lea.vmem [#allocation8], %s423
        // Predicated region
        $region53: #{tpu_custom_call.1} parent=39 // pred_check
          %p425 = pneg %p181
        $region54: #{tpu_custom_call.1} parent=39 // pred_check_branch
          %427 = sbr.rel (%p425) target = $region56
        $region55: #{tpu_custom_call.1} parent=39 // pred_region
          %s429 = ssub.s32 128, 128
          %430 = vsyncadd %s421, %s429
          %s431 = smul.addr %s29, 2
          %s432 = sadd.s32 %s30, %s431
          %s433 = smul.addr %s432, 128
          %s434 = scalar_lea.hbm %s5, %s433
          %s436 = sshll.u32 %s424, 4
          %s437 = int_to_ptr.vmem [resolvable:$true] %s436
          %439 = dma.vmem_to_hbm [thread:$0]  %s437, 128, %s434, %s421
        $region56: #{tpu_custom_call.1} parent=39 // pred_fallthru
          _
      $region40: #{tpu_custom_call.1} parent=5 // pred_fallthru
        _
      %p440 = scmp.le.s32.totalorder 2, %s20
      // Predicated region
      $region57: #{tpu_custom_call.1} parent=5 // pred_check
        %p441 = pneg %p440
      $region58: #{tpu_custom_call.1} parent=5 // pred_check_branch
        %443 = sbr.rel (%p441) target = $region60
      $region59: #{tpu_custom_call.1} parent=5 // pred_region
        %s444 = ssub.s32 %s20, 2
        // Predicated region
        $region61: #{tpu_custom_call.1} parent=59 // pred_check
          %p445 = pneg %p187
        $region62: #{tpu_custom_call.1} parent=59 // pred_check_branch
          %447 = sbr.rel (%p445) target = $region64
        $region63: #{tpu_custom_call.1} parent=59 // pred_region
          %s448 = sand.u32 %s172, 1
          %s449 = scalar_lea.sflag [#allocation4], %s448
          %s450 = sand.u32 %s172, 1
          %s451 = smul.addr %s450, 8
          %s452 = scalar_lea.vmem [#allocation8], %s451
          %453 = dma.done %s449, 128
        $region64: #{tpu_custom_call.1} parent=59 // pred_fallthru
          _
      $region60: #{tpu_custom_call.1} parent=5 // pred_fallthru
        _
    $region6: #{tpu_custom_call.1} parent=1 // loop_footer
      %s24 = sadd.s32 1, %s20
    $region7: #{tpu_custom_call.1} parent=1 // loop_footer_branch
      %19 = sbr.rel target = $region3
    $region8: #{tpu_custom_call.1} parent=1 // loop_exit
      _
    %454 = vsyncpa [#allocation3], 1
    %s455 = scalar_lea.sflag [#allocation3], 1
    %456 = vsyncpa %s455, 1
    %457 = vsyncpa [#allocation6], 1
    %s458 = scalar_lea.sflag [#allocation6], 1
    %459 = vsyncpa %s458, 1
    %460 = vsyncpa [#allocation4], 1
    %s461 = scalar_lea.sflag [#allocation4], 1
    %462 = vsyncpa %s461, 1

</llo_original>
